<compile_context>
chip_gen: v5e
topology: v5e:2x2
jax: 0.10.0
libtpu: 0.0.40
codegen_flags: <defaults>
</compile_context>

<pallas_src>
import functools

import jax
import jax.numpy as jnp
from jax.experimental import pallas as pl
from jax.experimental.pallas import tpu as pltpu


def _round_up(x, m):
    return ((x + m - 1) // m) * m


# -----------------------------------------------------------------------------
# Kernels
# -----------------------------------------------------------------------------
def _linear_single_block_kernel(x_ref, wt_ref, b_ref, o_ref):
    """Whole (padded) problem in one VMEM block: y = x @ wT + b."""
    y = jnp.dot(x_ref[...], wt_ref[...], preferred_element_type=jnp.float32)
    o_ref[...] = (y + b_ref[...].astype(jnp.float32)).astype(o_ref.dtype)


def _linear_tiled_kernel(x_ref, wt_ref, b_ref, o_ref, acc_ref):
    """M/N/K tiled matmul, f32 accumulator; bias folded into the K epilogue."""
    k = pl.program_id(2)

    @pl.when(k == 0)
    def _():
        acc_ref[...] = jnp.zeros_like(acc_ref)

    acc_ref[...] += jnp.dot(x_ref[...], wt_ref[...],
                            preferred_element_type=jnp.float32)

    @pl.when(k == pl.num_programs(2) - 1)
    def _():
        o_ref[...] = (acc_ref[...] + b_ref[...].astype(jnp.float32)
                      ).astype(o_ref.dtype)


# -----------------------------------------------------------------------------
# Wrapper: LinearMM.forward (Monte Carlo mode)
# -----------------------------------------------------------------------------
@functools.partial(jax.jit, static_argnames=("tm", "tn", "tk"))
def linear_mm_forward(x, weight, bias, *, tm=512, tn=512, tk=512):
    """y = x @ weight.T + bias, with x of shape (..., d_in), weight (d_out, d_in)."""
    orig_lead = x.shape[:-1]
    d_in = x.shape[-1]
    d_out = weight.shape[0]

    # Flatten any leading dims (e.g. stacked Monte-Carlo samples) into one M axis.
    x2 = x.reshape(-1, d_in)
    m = x2.shape[0]

    # Pre-transpose once, outside the kernel: (d_in, d_out), lane-dense on d_out.
    wt = weight.T
    b2 = bias.reshape(1, d_out)

    # Clamp tiles to the (sublane=8, lane=128)-aligned problem size.
    tm = min(tm, _round_up(m, 8))
    tk = min(tk, _round_up(d_in, 128))
    tn = min(tn, _round_up(d_out, 128))

    mp = _round_up(m, tm)
    kp = _round_up(d_in, tk)
    np_ = _round_up(d_out, tn)

    # Zero-pad to tile multiples (exact for matmul; extra rows/cols sliced off).
    x_p = x2 if (mp == m and kp == d_in) else jnp.pad(
        x2, ((0, mp - m), (0, kp - d_in)))
    wt_p = wt if (kp == d_in and np_ == d_out) else jnp.pad(
        wt, ((0, kp - d_in), (0, np_ - d_out)))
    b_p = b2 if np_ == d_out else jnp.pad(b2, ((0, 0), (0, np_ - d_out)))

    grid = (mp // tm, np_ // tn, kp // tk)

    if grid == (1, 1, 1):
        # Single-block fast path: no grid, no pipeline bookkeeping.
        out = pl.pallas_call(
            _linear_single_block_kernel,
            out_shape=jax.ShapeDtypeStruct((mp, np_), x.dtype),
            in_specs=[
                pl.BlockSpec(memory_space=pltpu.MemorySpace.VMEM),
                pl.BlockSpec(memory_space=pltpu.MemorySpace.VMEM),
                pl.BlockSpec(memory_space=pltpu.MemorySpace.VMEM),
            ],
            out_specs=pl.BlockSpec(memory_space=pltpu.MemorySpace.VMEM),
        )(x_p, wt_p, b_p)
    else:
        out = pl.pallas_call(
            _linear_tiled_kernel,
            out_shape=jax.ShapeDtypeStruct((mp, np_), x.dtype),
            grid_spec=pltpu.PrefetchScalarGridSpec(
                num_scalar_prefetch=0,
                grid=grid,
                in_specs=[
                    pl.BlockSpec((tm, tk), lambda i, j, k: (i, k)),
                    pl.BlockSpec((tk, tn), lambda i, j, k: (k, j)),
                    pl.BlockSpec((1, tn), lambda i, j, k: (0, j)),
                ],
                out_specs=pl.BlockSpec((tm, tn), lambda i, j, k: (i, j)),
                scratch_shapes=[pltpu.VMEM((tm, tn), jnp.float32)],
            ),
            compiler_params=pltpu.CompilerParams(
                # M/N parallel (v7x 2-TC sharding); K (reduction) arbitrary, last.
                dimension_semantics=("parallel", "parallel", "arbitrary"),
            ),
        )(x_p, wt_p, b_p)

    y = out[:m, :d_out]
    return y.reshape(orig_lead + (d_out,))


# TODO(synk): next_moments()/jac() (moment-matching mode) are separate methods
# and are not part of forward(); not implemented here.


if __name__ == "__main__":
    key = jax.random.PRNGKey(0)
    k1, k2, k3, k4, k5, k6, k7 = jax.random.split(key, 7)
    HI = jax.lax.Precision.HIGHEST

    # --- Test 1: module's native small shapes (Monte Carlo mode) ------------
    batch, d_in, d_out = 8, 32, 16
    bound = 1.0 / (d_in ** 0.5)
    x = jax.random.normal(k1, (batch, d_in), dtype=jnp.float32)
    weight = jax.random.uniform(k2, (d_out, d_in), minval=-bound, maxval=bound,
                                dtype=jnp.float32)
    bias = jax.random.uniform(k3, (d_out,), minval=-bound, maxval=bound,
                              dtype=jnp.float32)

    y = jax.block_until_ready(linear_mm_forward(x, weight, bias))
    y_ref = jnp.dot(x, weight.T, precision=HI) + bias[None, :]
    assert y.shape == (batch, d_out)
    assert jnp.allclose(y, y_ref, atol=1e-4, rtol=1e-4), "test1 mismatch"

    # --- Test 2: stacked Monte-Carlo samples, one lane-dense batched call ---
    S = 16
    x_mc = jax.random.normal(k4, (S, batch, d_in), dtype=jnp.float32)
    y_mc = jax.block_until_ready(linear_mm_forward(x_mc, weight, bias))
    y_mc_ref = jnp.einsum("sbi,oi->sbo", x_mc, weight, precision=HI) + bias
    assert y_mc.shape == (S, batch, d_out)
    assert jnp.allclose(y_mc, y_mc_ref, atol=1e-4, rtol=1e-4), "test2 mismatch"

    # --- Test 3: larger shapes exercise the M/N/K-tiled (grid) path ---------
    m2, k2d, n2 = 256, 256, 256
    x_big = jax.random.normal(k5, (m2, k2d), dtype=jnp.float32)
    w_big = jax.random.normal(k6, (n2, k2d), dtype=jnp.float32) * 0.05
    b_big = jax.random.normal(k7, (n2,), dtype=jnp.float32)
    y_big = jax.block_until_ready(
        linear_mm_forward(x_big, w_big, b_big, tm=128, tn=128, tk=128))
    y_big_ref = jnp.dot(x_big, w_big.T, precision=HI) + b_big[None, :]
    assert y_big.shape == (m2, n2)
    assert jnp.allclose(y_big, y_big_ref, atol=5e-3, rtol=5e-3), "test3 mismatch"

    print("KERNEL_OK")
</pallas_src>

<mosaic_0001>
module attributes {stable_mosaic.version = 11 : i64} {
  func.func @_linear_single_block_kernel(%arg0: memref<8x128xf32, #tpu.memory_space<vmem>>, %arg1: memref<128x128xf32, #tpu.memory_space<vmem>>, %arg2: memref<1x128xf32, #tpu.memory_space<vmem>>, %arg3: memref<8x128xf32, #tpu.memory_space<vmem>>) attributes {dimension_semantics = [], scalar_prefetch = 0 : i64, scratch_operands = 0 : i64, tpu.core_type = #tpu.core_type<tc>} {
    %c0 = arith.constant 0 : index
    %c0_0 = arith.constant 0 : index
    %0 = vector.load %arg0[%c0, %c0_0] : memref<8x128xf32, #tpu.memory_space<vmem>>, vector<8x128xf32>
    %c0_1 = arith.constant 0 : index
    %c0_2 = arith.constant 0 : index
    %1 = vector.load %arg1[%c0_1, %c0_2] : memref<128x128xf32, #tpu.memory_space<vmem>>, vector<128x128xf32>
    %cst = arith.constant dense<0.000000e+00> : vector<8x128xf32>
    %2 = tpu.matmul %0, %1, %cst {dimension_numbers = #tpu.dot_dimension_numbers<[1], [0], [0], [1], [0, 0, 1, 1], [], []>} : vector<8x128xf32>, vector<128x128xf32>, vector<8x128xf32> -> vector<8x128xf32>
    %c0_3 = arith.constant 0 : index
    %c0_4 = arith.constant 0 : index
    %3 = vector.load %arg2[%c0_3, %c0_4] : memref<1x128xf32, #tpu.memory_space<vmem>>, vector<1x128xf32>
    %4 = vector.broadcast %3 : vector<1x128xf32> to vector<8x128xf32>
    %5 = arith.addf %2, %4 : vector<8x128xf32>
    %c0_5 = arith.constant 0 : index
    %c0_6 = arith.constant 0 : index
    %6 = vector.load %arg3[%c0_5, %c0_6] : memref<8x128xf32, #tpu.memory_space<vmem>>, vector<8x128xf32>
    tpu.vector_store %arg3[%c0_5, %c0_6], %5 {strides = array<i32>} : memref<8x128xf32, #tpu.memory_space<vmem>>, vector<8x128xf32>,
    return
  }
}

</mosaic_0001>

<llo_original>
// kernel: linear_mm_forward.1
$region0: #{linear_mm_forward.1}
  #allocation0 [shape = 'u32[]', space=smem, size = 0x4, offset = 0x4, fixed_abs, tag = 'smem constant byte address 0x4 - core index']
  #allocation1 [shape = 'u32[72,128]{1,0:T(1,128)}', space=vmem, size = 0x9000, scoped, tag = 'internal scratch']
  %s0 = inlined_call_operand.vmem [shape: f32[8,128], index: 0, kind: input, shape index: {}]
  %s1 = inlined_call_operand.vmem [shape: f32[128,128], index: 1, kind: input, shape index: {}]
  %s2 = inlined_call_operand.vmem [shape: f32[1,128], index: 2, kind: input, shape index: {}]
  %s3 = inlined_call_operand.hbm [shape: f32[8,128], index: 3, kind: output, shape index: {}]
  %s4 = sld [smem:[#allocation0]]
  $region22: #{linear_mm_forward.1} parent=0
    _
  %s6 = ssub.s32 1, %s4
  %s7 = scalar_select 0, %s6, %s4
  $region1: #{linear_mm_forward.1} parent=0
    #allocation2 [shape = 'u8[4096]{0}', space=vmem, size = 0x1000, scoped, tag = 'output window, operand 0, single buffered']
    #allocation3 [shape = 's32[1]{0}', space=sflag, size = 0x4, scoped, tag = 'scoped memory for linear_mm_forward.1']
    %8 = vsyncpa [#allocation3], 0
    // Predicated region
    $region2: #{linear_mm_forward.1} parent=1 // pred_check
      _
    $region3: #{linear_mm_forward.1} parent=1 // pred_check_branch
      %10 = sbr.rel (0) target = $region5
    $region4: #{linear_mm_forward.1} parent=1 // pred_region
      _
    $region5: #{linear_mm_forward.1} parent=1 // pred_fallthru
      _
    // Predicated region
    $region6: #{linear_mm_forward.1} parent=1 // pred_check
      _
    $region7: #{linear_mm_forward.1} parent=1 // pred_check_branch
      %12 = sbr.rel (0) target = $region9
    $region8: #{linear_mm_forward.1} parent=1 // pred_region
      _
    $region9: #{linear_mm_forward.1} parent=1 // pred_fallthru
      _
    // Predicated region
    $region10: #{linear_mm_forward.1} parent=1 // pred_check
      _
    $region11: #{linear_mm_forward.1} parent=1 // pred_check_branch
      %14 = sbr.rel (0) target = $region13
    $region12: #{linear_mm_forward.1} parent=1 // pred_region
      _
    $region13: #{linear_mm_forward.1} parent=1 // pred_fallthru
      _
    %v15 = vld [vmem:[%s0] sm:$0xff]
    %v16 = vld [vmem:[%s1] sm:$0xff]
    %v17 = vld [vmem:[%s1 + $0x8] sm:$0xff]
    %v18 = vld [vmem:[%s1 + $0x10] sm:$0xff]
    %v19 = vld [vmem:[%s1 + $0x18] sm:$0xff]
    %v20 = vld [vmem:[%s1 + $0x20] sm:$0xff]
    %v21 = vld [vmem:[%s1 + $0x28] sm:$0xff]
    %v22 = vld [vmem:[%s1 + $0x30] sm:$0xff]
    %v23 = vld [vmem:[%s1 + $0x38] sm:$0xff]
    %v24 = vld [vmem:[%s1 + $0x40] sm:$0xff]
    %v25 = vld [vmem:[%s1 + $0x48] sm:$0xff]
    %v26 = vld [vmem:[%s1 + $0x50] sm:$0xff]
    %v27 = vld [vmem:[%s1 + $0x58] sm:$0xff]
    %v28 = vld [vmem:[%s1 + $0x60] sm:$0xff]
    %v29 = vld [vmem:[%s1 + $0x68] sm:$0xff]
    %v30 = vld [vmem:[%s1 + $0x70] sm:$0xff]
    %v31 = vld [vmem:[%s1 + $0x78] sm:$0xff]
    %v32 = vld [vmem:[%s2] sm:$0x1]
    %v34 = vperm.slane %v32, 0
    %36 = vmatpush.msra.mxu0 %v31
    %37 = vmatpush.msra.mxu0 %v30
    %38 = vmatpush.msra.mxu0 %v29
    %39 = vmatpush.msra.mxu0 %v28
    %40 = vmatpush.msra.mxu0 %v27
    %41 = vmatpush.msra.mxu0 %v26
    %42 = vmatpush.msra.mxu0 %v25
    %43 = vmatpush.msra.mxu0 %v24
    %44 = vmatpush.msra.mxu0 %v23
    %45 = vmatpush.msra.mxu0 %v22
    %46 = vmatpush.msra.mxu0 %v21
    %47 = vmatpush.msra.mxu0 %v20
    %48 = vmatpush.msra.mxu0 %v19
    %49 = vmatpush.msra.mxu0 %v18
    %50 = vmatpush.msra.mxu0 %v17
    %51 = vmatpush.msra.mxu0 %v16
    %52 = vmatmul.f32.gmra.mxu0 %v15
    %v53 = vpop.f32.mrf.mxu0
    %v54 = vadd.f32 %v34, %v53
    %55 = vdwg.mxu0
    %56 = vst [vmem:[#allocation2] sm:$0xff] %v54
    // Predicated region
    $region14: #{linear_mm_forward.1} parent=1 // pred_check
      _
    $region15: #{linear_mm_forward.1} parent=1 // pred_check_branch
      %58 = sbr.rel (0) target = $region17
    $region16: #{linear_mm_forward.1} parent=1 // pred_region
      %60 = vsyncadd [#allocation3], 0
      %s62 = sshll.u32 [#allocation2], 4
      %s63 = int_to_ptr.vmem [resolvable:$true] %s62
      %s64 = sshll.u32 %s3, 4
      %s65 = int_to_ptr.hbm [resolvable:$true] %s64
      %67 = dma.vmem_to_hbm [thread:$0]  %s63, 128, %s65, [#allocation3]
    $region17: #{linear_mm_forward.1} parent=1 // pred_fallthru
      _
    // Predicated region
    $region18: #{linear_mm_forward.1} parent=1 // pred_check
      _
    $region19: #{linear_mm_forward.1} parent=1 // pred_check_branch
      %69 = sbr.rel (0) target = $region21
    $region20: #{linear_mm_forward.1} parent=1 // pred_region
      %71 = dma.done [#allocation3], 128
    $region21: #{linear_mm_forward.1} parent=1 // pred_fallthru
      _
    %72 = vsyncpa [#allocation3], 1

</llo_original>
